<compile_context>
chip_gen: v7x
topology: tpu7x:2x2x1
jax: 0.10.0
libtpu: 0.0.40
codegen_flags: <defaults>
</compile_context>

<pallas_src>
import jax
import jax.numpy as jnp
from jax.experimental import pallas as pl
from jax.experimental.pallas import tpu as pltpu

_LANE = 128
_SUB = 8


def _minvar_kernel(y_ref, acc_ref):
    """Accumulate per-(sublane,lane) sums of squared deviations over the batch.

    y_ref:   (B, TG, 8, 128) tile: full batch, TG groups of (8,128) features
    acc_ref: (1, 8, 128)     f32 output block, resident across the inner axis
    """
    j = pl.program_id(1)

    @pl.when(j == 0)
    def _():
        acc_ref[...] = jnp.zeros_like(acc_ref)

    y = y_ref[...].astype(jnp.float32)                    # (B, TG, 8, 128)
    b = y.shape[0]
    # Two-pass (mean, then squared diff) in f32: numerically robust.
    mean = jnp.sum(y, axis=0, keepdims=True) * (1.0 / b)  # cross-vreg VPU adds
    diff = y - mean
    # Fold batch and feature-groups into the (8,128) accumulator: pure VPU adds.
    acc_ref[...] += jnp.sum(diff * diff, axis=(0, 1))[None, :, :]


def min_variance(y, *, target_block_bytes=4 * 1024 * 1024, num_outer=2):
    """Pallas implementation of MinVariance.forward (self.param unused there)."""
    b = y.shape[0]
    if b < 2:
        # torch.std(..., unbiased=True) would give nan for B=1; fail loudly.
        raise ValueError("MinVariance needs batch >= 2 (unbiased std, ddof=1).")

    f = 1
    for d in y.shape[1:]:
        f *= d
    y2 = y.reshape(b, f)  # keep caller dtype; cast to f32 inside the kernel

    # Dense (groups, 8, 128) feature layout; tile "groups" so one input block is
    # ~target_block_bytes of f32 work (4 MiB -> per-step overhead is negligible
    # and double-buffered DMA stays well inside every generation's VMEM).
    s_total = pl.cdiv(f, _LANE)                 # sublanes of 128 features
    g_total = pl.cdiv(s_total, _SUB)            # groups of (8,128) features
    tg = max(1, target_block_bytes // (b * _SUB * _LANE * 4))
    tg = min(tg, g_total)

    n_blocks = pl.cdiv(g_total, tg)
    n_blocks = pl.cdiv(n_blocks, num_outer) * num_outer   # v7x: 2-way TC split
    n_inner = n_blocks // num_outer
    g_padded = n_blocks * tg
    f_padded = g_padded * _SUB * _LANE
    if f_padded != f:
        # Zero-padded feature columns are constant across the batch -> they
        # contribute exactly 0 variance, so padding is semantics-preserving.
        y2 = jnp.pad(y2, ((0, 0), (0, f_padded - f)))
    y3 = y2.reshape(b, g_padded, _SUB, _LANE)

    itemsize = jnp.dtype(y.dtype).itemsize
    cost = pl.CostEstimate(
        flops=5 * b * f_padded,
        transcendentals=0,
        bytes_accessed=b * f_padded * itemsize + num_outer * _SUB * _LANE * 4,
    )

    partials = pl.pallas_call(
        _minvar_kernel,
        out_shape=jax.ShapeDtypeStruct((num_outer, _SUB, _LANE), jnp.float32),
        grid_spec=pltpu.PrefetchScalarGridSpec(
            num_scalar_prefetch=0,
            grid=(num_outer, n_inner),
            in_specs=[
                pl.BlockSpec(
                    (b, tg, _SUB, _LANE),
                    lambda o, j: (0, o * n_inner + j, 0, 0),
                )
            ],
            out_specs=pl.BlockSpec((1, _SUB, _LANE), lambda o, j: (o, 0, 0)),
        ),
        compiler_params=pltpu.CompilerParams(
            dimension_semantics=("parallel", "arbitrary"),
            vmem_limit_bytes=32 * 1024 * 1024,
        ),
        cost_estimate=cost,
    )(y3)

    # One global reduce + ddof=1 normalization + sqrt, on 2*8*128 floats (JAX).
    return jnp.sqrt(jnp.sum(partials) * (1.0 / (b - 1)))


if __name__ == "__main__":
    key = jax.random.PRNGKey(0)
    # Small NCHW "measurements" tensor.
    x = jax.random.normal(key, (2, 4, 16, 16), dtype=jnp.float32)
    loss = jax.block_until_ready(min_variance(x))
    ref = jnp.linalg.norm(jnp.std(x, axis=0, ddof=1))
    assert jnp.allclose(loss, ref, rtol=1e-5, atol=1e-5), (loss, ref)

    # Ragged feature count (exercises the zero-pad path) and B > 2.
    x2 = jax.random.normal(jax.random.PRNGKey(1), (4, 3, 10, 7), dtype=jnp.float32)
    loss2 = jax.block_until_ready(min_variance(x2))
    ref2 = jnp.linalg.norm(jnp.std(x2, axis=0, ddof=1))
    assert jnp.allclose(loss2, ref2, rtol=1e-5, atol=1e-5), (loss2, ref2)

    print("KERNEL_OK")
</pallas_src>

<mosaic_0001>
module attributes {stable_mosaic.version = 11 : i64} {
  func.func @_minvar_kernel(%arg0: i32, %arg1: i32, %arg2: memref<2x1x8x128xf32, #tpu.memory_space<vmem>>, %arg3: memref<1x8x128xf32, #tpu.memory_space<vmem>>) attributes {dimension_semantics = [#tpu.dimension_semantics<parallel>, #tpu.dimension_semantics<arbitrary>], iteration_bounds = array<i64: 2, 1>, scalar_prefetch = 0 : i64, scratch_operands = 0 : i64, tpu.core_type = #tpu.core_type<tc>, window_params = [{transform_indices = @transform_0, window_bounds = array<i64: 2, 1, 8, 128>}, {transform_indices = @transform_1, window_bounds = array<i64: 1, 8, 128>}]} {
    %c0_i32 = arith.constant 0 : i32
    %0 = arith.cmpi eq, %arg1, %c0_i32 : i32
    %1 = arith.extui %0 : i1 to i32
    %c0_i32_0 = arith.constant 0 : i32
    %2 = arith.cmpi ne, %1, %c0_i32_0 : i32
    scf.if %2 {
      %cst_12 = arith.constant 0.000000e+00 : f32
      %16 = vector.broadcast %cst_12 : f32 to vector<1x8x128xf32>
      %c0_13 = arith.constant 0 : index
      %c0_14 = arith.constant 0 : index
      %c0_15 = arith.constant 0 : index
      %17 = vector.load %arg3[%c0_13, %c0_14, %c0_15] : memref<1x8x128xf32, #tpu.memory_space<vmem>>, vector<1x8x128xf32>
      tpu.vector_store %arg3[%c0_13, %c0_14, %c0_15], %16 {strides = array<i32>} : memref<1x8x128xf32, #tpu.memory_space<vmem>>, vector<1x8x128xf32>,
    } else {
    }
    %c0 = arith.constant 0 : index
    %c0_1 = arith.constant 0 : index
    %c0_2 = arith.constant 0 : index
    %c0_3 = arith.constant 0 : index
    %3 = vector.load %arg2[%c0, %c0_1, %c0_2, %c0_3] : memref<2x1x8x128xf32, #tpu.memory_space<vmem>>, vector<2x1x8x128xf32>
    %cst = arith.constant dense<0.000000e+00> : vector<1x8x128xf32>
    %4 = vector.multi_reduction <add>, %3, %cst [0] : vector<2x1x8x128xf32> to vector<1x8x128xf32>
    %5 = vector.shape_cast %4 : vector<1x8x128xf32> to vector<1x1x8x128xf32>
    %cst_4 = arith.constant 5.000000e-01 : f32
    %6 = vector.broadcast %cst_4 : f32 to vector<1x1x8x128xf32>
    %7 = arith.mulf %5, %6 : vector<1x1x8x128xf32>
    %8 = vector.broadcast %7 : vector<1x1x8x128xf32> to vector<2x1x8x128xf32>
    %9 = arith.subf %3, %8 : vector<2x1x8x128xf32>
    %c0_5 = arith.constant 0 : index
    %c0_6 = arith.constant 0 : index
    %c0_7 = arith.constant 0 : index
    %10 = vector.load %arg3[%c0_5, %c0_6, %c0_7] : memref<1x8x128xf32, #tpu.memory_space<vmem>>, vector<1x8x128xf32>
    %11 = arith.mulf %9, %9 : vector<2x1x8x128xf32>
    %cst_8 = arith.constant dense<0.000000e+00> : vector<8x128xf32>
    %12 = vector.multi_reduction <add>, %11, %cst_8 [0, 1] : vector<2x1x8x128xf32> to vector<8x128xf32>
    %13 = vector.shape_cast %12 : vector<8x128xf32> to vector<1x8x128xf32>
    %14 = arith.addf %10, %13 : vector<1x8x128xf32>
    %c0_9 = arith.constant 0 : index
    %c0_10 = arith.constant 0 : index
    %c0_11 = arith.constant 0 : index
    %15 = vector.load %arg3[%c0_9, %c0_10, %c0_11] : memref<1x8x128xf32, #tpu.memory_space<vmem>>, vector<1x8x128xf32>
    tpu.vector_store %arg3[%c0_9, %c0_10, %c0_11], %14 {strides = array<i32>} : memref<1x8x128xf32, #tpu.memory_space<vmem>>, vector<1x8x128xf32>,
    return
  }
  func.func @transform_0(%arg0: i32, %arg1: i32) -> (i32, i32, i32, i32) {
    %c1_i32 = arith.constant 1 : i32
    %0 = arith.muli %arg0, %c1_i32 : i32
    %1 = arith.addi %0, %arg1 : i32
    %c0_i32 = arith.constant 0 : i32
    %c0_i32_0 = arith.constant 0 : i32
    %c0_i32_1 = arith.constant 0 : i32
    %c0_i32_2 = arith.constant 0 : i32
    return %c0_i32, %1, %c0_i32_0, %c0_i32_1 : i32, i32, i32, i32
  }
  func.func @transform_1(%arg0: i32, %arg1: i32) -> (i32, i32, i32) {
    %c0_i32 = arith.constant 0 : i32
    %c0_i32_0 = arith.constant 0 : i32
    %c0_i32_1 = arith.constant 0 : i32
    return %arg0, %c0_i32, %c0_i32_0 : i32, i32, i32
  }
}

</mosaic_0001>

<llo_original>
// kernel: tpu_custom_call.1
$region0: #{tpu_custom_call.1}
  #allocation0 [shape = 'u32[]', space=smem, size = 0x4, offset = 0x4, fixed_abs, tag = 'smem constant byte address 0x4 - core index']
  #allocation1 [shape = 'u32[144,128]{1,0:T(1,128)}', space=vmem, size = 0x12000, scoped, tag = 'internal scratch']
  %s0 = inlined_call_operand.hbm [shape: f32[2,2,8,128], index: 0, kind: input, shape index: {}]
  %s1 = inlined_call_operand.hbm [shape: f32[2,8,128], index: 1, kind: output, shape index: {}]
  %s2 = sld [smem:[#allocation0]]
  $region45: #{tpu_custom_call.1} parent=0
    _
  %s4 = ssub.s32 1, %s2
  %s5 = scalar_select 0, %s4, %s2
  $region1: #{tpu_custom_call.1} parent=0
    #allocation2 [shape = 'u8[16384]{0}', space=vmem, size = 0x4000, scoped, tag = 'input window, operand 0']
    #allocation3 [shape = 's32[2]{0}', space=sflag, size = 0x8, scoped, tag = 'scoped memory for tpu_custom_call.1']
    #allocation4 [shape = 's32[2]{0}', space=sflag, size = 0x8, scoped, tag = 'scoped memory for tpu_custom_call.1']
    #allocation5 [shape = 'u8[8192]{0}', space=vmem, size = 0x2000, scoped, tag = 'output window, operand 0']
    %6 = vsyncpa [#allocation3], 0
    %s7 = scalar_lea.sflag [#allocation3], 1
    %8 = vsyncpa %s7, 0
    %9 = vsyncpa [#allocation4], 0
    %s10 = scalar_lea.sflag [#allocation4], 1
    %11 = vsyncpa %s10, 0
    loop: start=0, step=1, limit=4
    $region2: #{tpu_custom_call.1} parent=1 // loop_pre_header
      _
    $region3: #{tpu_custom_call.1} parent=1 // loop_header
      %s13 = sphi 0, %s17
      %p14 = scmp.ge.s32.totalorder %s13, 4
      %s20 = sphi 0, %s32
      %s21 = sphi 0, %s28
      %s22 = sphi 0, %s20
      %s23 = sphi 0, %s21
      %s24 = sphi 0, %s22
      %s25 = sphi 0, %s23
      %s37 = sphi 0, %s39
      %s40 = sphi 0, %s37
      %s41 = sphi 0, %s40
      %s57 = sphi 0, %s41
      %s63 = sphi 0, %s65
      %s66 = sphi 0, %s63
      %s67 = sphi 0, %s66
      %s83 = sphi 0, %s67
    $region4: #{tpu_custom_call.1} parent=1 // loop_header_branch
      %16 = sbr.rel (%p14) target = $region8
    $region5: #{tpu_custom_call.1} parent=1 // loop_body
      %s18 = ssub.s32 %s13, 1
      %s19 = ssub.s32 %s13, 2
      %s26 = sadd.s32 1, %s21
      %p27 = scmp.ge.s32.totalorder %s26, 1
      %s28 = scalar_select %p27, 0, %s26
      %s29 = sadd.s32 1, %s20
      %s30 = scalar_select %p27, %s29, %s20
      %p31 = scmp.ge.s32.totalorder %s30, 2
      %s32 = scalar_select %p31, 0, %s30
      %s33 = sadd.s32 %s20, %s21
      %s34 = sadd.s32 %s32, %s28
      %s35 = ssub.s32 %s33, %s34
      %p36 = scmp.eq.s32.totalorder %s35, 0
      %s38 = sadd.s32 %s37, 1
      %s39 = scalar_select %p36, %s37, %s38
      %p42 = pneg %p36
      %p43 = scmp.eq.s32.totalorder %s13, 1
      %p44 = por %p42, %p43
      %p45 = scmp.ne.s32.totalorder %s37, %s40
      %p46 = scmp.eq.s32.totalorder %s13, 0
      %p47 = por %p45, %p46
      %p48 = scmp.ne.s32.totalorder %s37, %s40
      %p49 = scmp.eq.s32.totalorder %s18, 1
      %p50 = por %p48, %p49
      %p51 = scmp.ne.s32.totalorder %s40, %s41
      %p52 = scmp.eq.s32.totalorder %s18, 0
      %p53 = por %p51, %p52
      %p54 = scmp.ne.s32.totalorder %s40, %s41
      %p55 = scmp.eq.s32.totalorder %s19, 1
      %p56 = por %p54, %p55
      %p58 = scmp.ne.s32.totalorder %s41, %s57
      %p59 = scmp.eq.s32.totalorder %s19, 0
      %p60 = por %p58, %p59
      %s61 = ssub.s32 %s20, %s32
      %p62 = scmp.eq.s32.totalorder %s61, 0
      %s64 = sadd.s32 %s63, 1
      %s65 = scalar_select %p62, %s63, %s64
      %p68 = pneg %p62
      %p69 = scmp.eq.s32.totalorder %s13, 1
      %p70 = por %p68, %p69
      %p71 = scmp.ne.s32.totalorder %s63, %s66
      %p72 = scmp.eq.s32.totalorder %s13, 0
      %p73 = por %p71, %p72
      %p74 = scmp.ne.s32.totalorder %s63, %s66
      %p75 = scmp.eq.s32.totalorder %s18, 1
      %p76 = por %p74, %p75
      %p77 = scmp.ne.s32.totalorder %s66, %s67
      %p78 = scmp.eq.s32.totalorder %s18, 0
      %p79 = por %p77, %p78
      %p80 = scmp.ne.s32.totalorder %s66, %s67
      %p81 = scmp.eq.s32.totalorder %s19, 1
      %p82 = por %p80, %p81
      %p84 = scmp.ne.s32.totalorder %s67, %s83
      %p85 = scmp.eq.s32.totalorder %s19, 0
      %p86 = por %p84, %p85
      %p87 = scmp.le.s32.totalorder 1, %s13
      %p88 = scmp.lt.s32.totalorder %s13, 3
      %p89 = pnand %p87, %p88
      %p90 = pneg %p89
      // Predicated region
      $region9: #{tpu_custom_call.1} parent=5 // pred_check
        _
      $region10: #{tpu_custom_call.1} parent=5 // pred_check_branch
        %92 = sbr.rel (%p89) target = $region12
      $region11: #{tpu_custom_call.1} parent=5 // pred_region
        %s93 = ssub.s32 %s13, 1
      $region12: #{tpu_custom_call.1} parent=5 // pred_fallthru
        _
      %p94 = scmp.lt.s32.totalorder %s13, 2
      // Predicated region
      $region13: #{tpu_custom_call.1} parent=5 // pred_check
        %p95 = pneg %p94
      $region14: #{tpu_custom_call.1} parent=5 // pred_check_branch
        %97 = sbr.rel (%p95) target = $region16
      $region15: #{tpu_custom_call.1} parent=5 // pred_region
        // Predicated region
        $region17: #{tpu_custom_call.1} parent=15 // pred_check
          %p98 = pneg %p47
        $region18: #{tpu_custom_call.1} parent=15 // pred_check_branch
          %100 = sbr.rel (%p98) target = $region20
        $region19: #{tpu_custom_call.1} parent=15 // pred_region
          %s101 = sand.u32 %s37, 1
          %s102 = scalar_lea.sflag [#allocation3], %s101
          %s103 = sand.u32 %s37, 1
          %s104 = smul.addr %s103, 16
          %s105 = scalar_lea.vmem [#allocation2], %s104
          %s106 = sadd.s32 %s20, %s21
          %s108 = ssub.s32 256, 256
          %109 = vsyncadd %s102, %s108
          %s110 = smul.addr %s106, 128
          %s111 = scalar_lea.hbm %s0, %s110
          %s112 = sshll.u32 %s105, 4
          %s113 = int_to_ptr.vmem [resolvable:$true] %s112
          %118 = dma.hbm_to_vmem [thread:$0]  %s111, 256, %s113, %s102, 256, 128, 8
        $region20: #{tpu_custom_call.1} parent=15 // pred_fallthru
          _
      $region16: #{tpu_custom_call.1} parent=5 // pred_fallthru
        _
      %p119 = scmp.le.s32.totalorder 1, %s13
      %p120 = scmp.lt.s32.totalorder %s13, 3
      %p121 = pnand %p119, %p120
      %p122 = pneg %p121
      // Predicated region
      $region21: #{tpu_custom_call.1} parent=5 // pred_check
        _
      $region22: #{tpu_custom_call.1} parent=5 // pred_check_branch
        %124 = sbr.rel (%p121) target = $region24
      $region23: #{tpu_custom_call.1} parent=5 // pred_region
        %s125 = ssub.s32 %s13, 1
        %s126 = sand.u32 %s40, 1
        %s127 = scalar_lea.sflag [#allocation3], %s126
        %s128 = sand.u32 %s40, 1
        %s129 = smul.addr %s128, 16
        %s130 = scalar_lea.vmem [#allocation2], %s129
        // Predicated region
        $region25: #{tpu_custom_call.1} parent=23 // pred_check
          %p131 = pneg %p53
        $region26: #{tpu_custom_call.1} parent=23 // pred_check_branch
          %133 = sbr.rel (%p131) target = $region28
        $region27: #{tpu_custom_call.1} parent=23 // pred_region
          %134 = dma.done %s127, 256
        $region28: #{tpu_custom_call.1} parent=23 // pred_fallthru
          _
        %s135 = sand.u32 %s40, 1
        %s136 = scalar_lea.sflag [#allocation3], %s135
        %s137 = sand.u32 %s40, 1
        %s138 = smul.addr %s137, 16
        %s139 = scalar_lea.vmem [#allocation2], %s138
        %p140 = pneg %p53
        %p141 = pneg %p50
        %p142 = pneg %p79
        %p143 = pneg %p76
        %s144 = sand.u32 %s66, 1
        %s145 = scalar_lea.sflag [#allocation4], %s144
        %s146 = sand.u32 %s66, 1
        %s147 = smul.addr %s146, 8
        %s148 = scalar_lea.vmem [#allocation5], %s147
        %s149 = sadd.s32 %s22, %s23
        %p150 = scmp.eq.s32.totalorder %s23, 0
        // Predicated region
        $region29: #{tpu_custom_call.1} parent=23 // pred_check
          %p151 = pneg %p150
        $region30: #{tpu_custom_call.1} parent=23 // pred_check_branch
          %153 = sbr.rel (%p151) target = $region32
        $region31: #{tpu_custom_call.1} parent=23 // pred_region
          %154 = vst [vmem:[%s148] sm:$0xff] 0.0
        $region32: #{tpu_custom_call.1} parent=23 // pred_fallthru
          _
        %v155 = vld [vmem:[%s130] sm:$0xff]
        %v156 = vld [vmem:[%s130 + $0x8] sm:$0xff]
        %v157 = vadd.f32 %v155, %v156
        %v158 = vmul.f32 %v157, 0.5
        %v159 = vsub.f32 %v155, %v158
        %v160 = vsub.f32 %v156, %v158
        %v161 = vld [vmem:[%s148] sm:$0xff]
        %v162 = vmul.f32 %v159, %v159
        %v163 = vmul.f32 %v160, %v160
        %v164 = vadd.f32 %v162, %v163
        %v165 = vadd.f32 %v161, %v164
        %166 = vst [vmem:[%s148] sm:$0xff] %v165
        %s167 = sand.u32 %s66, 1
        %s168 = scalar_lea.sflag [#allocation4], %s167
        %s169 = sand.u32 %s66, 1
        %s170 = smul.addr %s169, 8
        %s171 = scalar_lea.vmem [#allocation5], %s170
        // Predicated region
        $region33: #{tpu_custom_call.1} parent=23 // pred_check
          %p172 = pneg %p76
        $region34: #{tpu_custom_call.1} parent=23 // pred_check_branch
          %174 = sbr.rel (%p172) target = $region36
        $region35: #{tpu_custom_call.1} parent=23 // pred_region
          %s176 = ssub.s32 128, 128
          %177 = vsyncadd %s168, %s176
          %s178 = smul.addr %s22, 128
          %s179 = scalar_lea.hbm %s1, %s178
          %s181 = sshll.u32 %s171, 4
          %s182 = int_to_ptr.vmem [resolvable:$true] %s181
          %184 = dma.vmem_to_hbm [thread:$0]  %s182, 128, %s179, %s168
        $region36: #{tpu_custom_call.1} parent=23 // pred_fallthru
          _
      $region24: #{tpu_custom_call.1} parent=5 // pred_fallthru
        _
      %p185 = scmp.le.s32.totalorder 2, %s13
      // Predicated region
      $region37: #{tpu_custom_call.1} parent=5 // pred_check
        %p186 = pneg %p185
      $region38: #{tpu_custom_call.1} parent=5 // pred_check_branch
        %188 = sbr.rel (%p186) target = $region40
      $region39: #{tpu_custom_call.1} parent=5 // pred_region
        %s189 = ssub.s32 %s13, 2
        // Predicated region
        $region41: #{tpu_custom_call.1} parent=39 // pred_check
          %p190 = pneg %p82
        $region42: #{tpu_custom_call.1} parent=39 // pred_check_branch
          %192 = sbr.rel (%p190) target = $region44
        $region43: #{tpu_custom_call.1} parent=39 // pred_region
          %s193 = sand.u32 %s67, 1
          %s194 = scalar_lea.sflag [#allocation4], %s193
          %s195 = sand.u32 %s67, 1
          %s196 = smul.addr %s195, 8
          %s197 = scalar_lea.vmem [#allocation5], %s196
          %198 = dma.done %s194, 128
        $region44: #{tpu_custom_call.1} parent=39 // pred_fallthru
          _
      $region40: #{tpu_custom_call.1} parent=5 // pred_fallthru
        _
    $region6: #{tpu_custom_call.1} parent=1 // loop_footer
      %s17 = sadd.s32 1, %s13
    $region7: #{tpu_custom_call.1} parent=1 // loop_footer_branch
      %12 = sbr.rel target = $region3
    $region8: #{tpu_custom_call.1} parent=1 // loop_exit
      _
    %199 = vsyncpa [#allocation3], 1
    %s200 = scalar_lea.sflag [#allocation3], 1
    %201 = vsyncpa %s200, 1
    %202 = vsyncpa [#allocation4], 1
    %s203 = scalar_lea.sflag [#allocation4], 1
    %204 = vsyncpa %s203, 1

</llo_original>
